<compile_context>
chip_gen: v7x
topology: tpu7x:2x2x1
jax: 0.10.0
libtpu: 0.0.40
codegen_flags: <defaults>
</compile_context>

<pallas_src>
import jax
import jax.numpy as jnp
import numpy as np
from jax.experimental import pallas as pl
from jax.experimental.pallas import tpu as pltpu

_EPS_BN = 1e-5            # nn.BatchNorm1d default eps
_EPS_LN = 1e-5            # custom LayerNorm default eps
_LRELU_SLOPE = 0.2        # nn.LeakyReLU(0.2)
_SELU_ALPHA = 1.6732632423543772
_SELU_SCALE = 1.0507009873554805


# ----------------------------------------------------------------------------
# SpectralNorm weight preparation (tiny matvecs; done in plain JAX, no kernel)
# ----------------------------------------------------------------------------
def _l2normalize(v, eps=1e-12):
    return v / (jnp.linalg.norm(v) + eps)


def spectral_normalize(w, u, v, power_iterations=1, eps=1e-12):
    """w: (Dout, Din) torch layout. Returns (w / sigma, u_new, v_new)."""
    height = w.shape[0]
    wm = w.reshape(height, -1)
    for _ in range(power_iterations):
        v = _l2normalize(wm.T @ u, eps)
        u = _l2normalize(wm @ v, eps)
    sigma = jnp.dot(u, wm @ v)
    return w / sigma, u, v


# ----------------------------------------------------------------------------
# Fused Linear + norm + activation kernel
# ----------------------------------------------------------------------------
def _activation_f32(y, activation, a_scalar):
    if activation == "relu":
        return jnp.maximum(y, 0.0)
    if activation == "lrelu":
        return jnp.where(y >= 0, y, _LRELU_SLOPE * y)
    if activation == "prelu":
        return jnp.where(y >= 0, y, a_scalar * y)
    if activation == "selu":
        return _SELU_SCALE * jnp.where(y > 0, y, _SELU_ALPHA * (jnp.exp(y) - 1.0))
    if activation == "tanh":
        return jnp.tanh(y)
    if activation == "none":
        return y
    raise ValueError(f"Unsupported activation: {activation}")


def _make_linear_block_kernel(norm, activation, add_bias, dout):
    def kernel(x_ref, w_ref, b_ref, g_ref, bt_ref, a_ref, o_ref, acc_ref):
        k = pl.program_id(2)

        @pl.when(k == 0)
        def _init():
            acc_ref[...] = jnp.zeros_like(acc_ref)

        # bf16 operands on the MXU, f32 accumulation into VMEM scratch.
        acc_ref[...] += jnp.dot(
            x_ref[...].astype(jnp.bfloat16),
            w_ref[...].astype(jnp.bfloat16),
            preferred_element_type=jnp.float32,
        )

        @pl.when(k == pl.num_programs(2) - 1)
        def _finalize():
            y = acc_ref[...]
            if add_bias:
                y = y + b_ref[...].astype(jnp.float32)
            if norm == "ln":
                # custom LayerNorm: per-sample over features, unbiased std,
                # divide by (std + eps), then affine gamma/beta.
                mean = jnp.mean(y, axis=1, keepdims=True)
                d = y - mean
                var_unb = jnp.sum(d * d, axis=1, keepdims=True) / float(dout - 1)
                y = d / (jnp.sqrt(var_unb) + _EPS_LN)
                y = y * g_ref[...] + bt_ref[...]
            elif norm == "batch":
                # BatchNorm1d (training-mode batch stats, biased variance).
                # Per-feature bias was cancelled by the batch mean -> skipped.
                mean = jnp.mean(y, axis=0, keepdims=True)
                var = jnp.mean((y - mean) * (y - mean), axis=0, keepdims=True)
                y = (y - mean) * jax.lax.rsqrt(var + _EPS_BN)
                y = y * g_ref[...] + bt_ref[...]
            y = _activation_f32(y, activation, a_ref[0, 0])
            o_ref[...] = y.astype(o_ref.dtype)

    return kernel


def _pick_tile(dim, preferred, unit):
    """Largest multiple of `unit` <= preferred that divides dim, else full dim."""
    if dim <= preferred:
        return dim
    t = (preferred // unit) * unit
    while t >= unit:
        if dim % t == 0:
            return t
        t -= unit
    return dim


def linear_block_forward(x, params, norm="none", activation="relu"):
    """x: (B, Din) f32; params['w']: (Dout, Din) torch layout; params['b']: (Dout,)."""
    B, Din = x.shape
    w = params["w"]
    b = params["b"]
    Dout = w.shape[0]

    if norm == "in":
        # TODO(synk): nn.InstanceNorm1d on a 2-D (B, C) Linear output is
        # ill-defined (raises in PyTorch); not implemented.
        raise NotImplementedError("norm='in' on a 2-D Linear output")

    if norm == "sn":
        # TODO(synk): PyTorch's SpectralNorm also mutates u/v in place;
        # here only the forward weight (w / sigma) is used.
        w, _, _ = spectral_normalize(w, params["u"], params["v"])

    wt = jnp.transpose(w).astype(x.dtype)                 # (Din, Dout)
    b2 = b.reshape(1, Dout).astype(jnp.float32)
    gamma = jnp.asarray(params.get("gamma", jnp.ones((Dout,), jnp.float32)),
                        jnp.float32).reshape(1, Dout)
    beta = jnp.asarray(params.get("beta", jnp.zeros((Dout,), jnp.float32)),
                       jnp.float32).reshape(1, Dout)
    aparam = jnp.asarray(params.get("prelu_w", 0.25), jnp.float32).reshape(1, 1)

    # BatchNorm over the batch subtracts the per-feature mean -> bias cancels.
    add_bias = norm != "batch"

    # Tile selection.  Norm statistics must span the full reduction extent:
    #  'ln'    -> whole feature dim per block (tile over batch only)
    #  'batch' -> whole batch dim per block   (tile over features only)
    tm = B if norm == "batch" else _pick_tile(B, 256, 8)
    tn = Dout if norm == "ln" else _pick_tile(Dout, 512, 128)
    tk = _pick_tile(Din, 256, 128)
    grid = (B // tm, Dout // tn, Din // tk)

    kernel = _make_linear_block_kernel(norm, activation, add_bias, Dout)
    out = pl.pallas_call(
        kernel,
        out_shape=jax.ShapeDtypeStruct((B, Dout), x.dtype),
        grid_spec=pltpu.PrefetchScalarGridSpec(
            num_scalar_prefetch=0,
            grid=grid,
            in_specs=[
                pl.BlockSpec((tm, tk), lambda i, j, k: (i, k)),   # x tile
                pl.BlockSpec((tk, tn), lambda i, j, k: (k, j)),   # W^T tile
                pl.BlockSpec((1, tn), lambda i, j, k: (0, j)),    # bias
                pl.BlockSpec((1, tn), lambda i, j, k: (0, j)),    # gamma
                pl.BlockSpec((1, tn), lambda i, j, k: (0, j)),    # beta
                pl.BlockSpec((1, 1), lambda i, j, k: (0, 0)),     # prelu weight
            ],
            out_specs=pl.BlockSpec((tm, tn), lambda i, j, k: (i, j)),
            scratch_shapes=[pltpu.VMEM((tm, tn), jnp.float32)],
        ),
        compiler_params=pltpu.CompilerParams(
            dimension_semantics=("parallel", "parallel", "arbitrary"),
            vmem_limit_bytes=64 * 1024 * 1024,
        ),
    )(x, wt, b2, gamma, beta, aparam)
    return out


# ----------------------------------------------------------------------------
# Plain-JAX reference (same bf16 matmul, f32 epilogue) for correctness check
# ----------------------------------------------------------------------------
def linear_block_reference(x, params, norm="none", activation="relu"):
    w = params["w"]
    b = params["b"]
    if norm == "sn":
        w, _, _ = spectral_normalize(w, params["u"], params["v"])
    y = jnp.dot(x.astype(jnp.bfloat16), w.T.astype(jnp.bfloat16),
                preferred_element_type=jnp.float32)
    if norm != "batch":
        y = y + b[None, :].astype(jnp.float32)
    if norm == "ln":
        mean = jnp.mean(y, axis=1, keepdims=True)
        std = jnp.std(y, axis=1, keepdims=True, ddof=1)
        y = (y - mean) / (std + _EPS_LN)
        y = y * params["gamma"][None, :] + params["beta"][None, :]
    elif norm == "batch":
        mean = jnp.mean(y, axis=0, keepdims=True)
        var = jnp.mean((y - mean) ** 2, axis=0, keepdims=True)
        y = (y - mean) * jax.lax.rsqrt(var + _EPS_BN)
        y = y * params["gamma"][None, :] + params["beta"][None, :]
    return _activation_f32(y, activation, jnp.float32(params.get("prelu_w", 0.25)))


# ----------------------------------------------------------------------------
if __name__ == "__main__":
    key = jax.random.PRNGKey(0)
    B, Din, Dout = 8, 512, 128   # Dout multiple of 128 -> lane-dense output

    key, kx, kw, kb, kg, ku, kv = jax.random.split(key, 7)
    x = jax.random.normal(kx, (B, Din), jnp.float32)
    w = 0.05 * jax.random.normal(kw, (Dout, Din), jnp.float32)
    b = 0.05 * jax.random.normal(kb, (Dout,), jnp.float32)
    gamma = jax.random.uniform(kg, (Dout,), jnp.float32)   # LayerNorm gamma ~ U(0,1)
    beta = jnp.zeros((Dout,), jnp.float32)
    u = _l2normalize(jax.random.normal(ku, (Dout,), jnp.float32))
    v = _l2normalize(jax.random.normal(kv, (Din,), jnp.float32))
    params = dict(w=w, b=b, gamma=gamma, beta=beta, u=u, v=v, prelu_w=0.25)

    configs = [
        ("none", "relu"),
        ("ln", "lrelu"),
        ("batch", "tanh"),
        ("sn", "selu"),
        ("none", "prelu"),
    ]
    for norm, act in configs:
        out = linear_block_forward(x, params, norm=norm, activation=act)
        out = jax.block_until_ready(out)
        ref = linear_block_reference(x, params, norm=norm, activation=act)
        np.testing.assert_allclose(np.asarray(out), np.asarray(ref),
                                   rtol=2e-3, atol=2e-3)
        assert out.shape == (B, Dout)

    print("KERNEL_OK")
</pallas_src>

<mosaic_0001>
module attributes {stable_mosaic.version = 11 : i64} {
  func.func @kernel(%arg0: i32, %arg1: i32, %arg2: i32, %arg3: memref<8x256xf32, #tpu.memory_space<vmem>>, %arg4: memref<256x128xf32, #tpu.memory_space<vmem>>, %arg5: memref<1x128xf32, #tpu.memory_space<vmem>>, %arg6: memref<1x128xf32, #tpu.memory_space<vmem>>, %arg7: memref<1x128xf32, #tpu.memory_space<vmem>>, %arg8: memref<1x1xf32, #tpu.memory_space<vmem>>, %arg9: memref<8x128xf32, #tpu.memory_space<vmem>>, %arg10: memref<8x128xf32, #tpu.memory_space<vmem>>) attributes {dimension_semantics = [#tpu.dimension_semantics<parallel>, #tpu.dimension_semantics<parallel>, #tpu.dimension_semantics<arbitrary>], iteration_bounds = array<i64: 1, 1, 2>, scalar_prefetch = 0 : i64, scratch_operands = 1 : i64, tpu.core_type = #tpu.core_type<tc>, window_params = [{transform_indices = @transform_0, window_bounds = array<i64: 8, 256>}, {transform_indices = @transform_1, window_bounds = array<i64: 256, 128>}, {transform_indices = @transform_2, window_bounds = array<i64: 1, 128>}, {transform_indices = @transform_3, window_bounds = array<i64: 1, 128>}, {transform_indices = @transform_4, window_bounds = array<i64: 1, 128>}, {pipeline_mode = #tpu.pipeline_mode<synchronous>, transform_indices = @transform_5, window_bounds = array<i64: 1, 1>}, {transform_indices = @transform_6, window_bounds = array<i64: 8, 128>}]} {
    %c0_i32 = arith.constant 0 : i32
    %0 = arith.cmpi eq, %arg2, %c0_i32 : i32
    %1 = arith.extui %0 : i1 to i32
    %c0_i32_0 = arith.constant 0 : i32
    %2 = arith.cmpi ne, %1, %c0_i32_0 : i32
    scf.if %2 {
      %cst_9 = arith.constant 0.000000e+00 : f32
      %14 = vector.broadcast %cst_9 : f32 to vector<8x128xf32>
      %c0_10 = arith.constant 0 : index
      %c0_11 = arith.constant 0 : index
      %15 = vector.load %arg10[%c0_10, %c0_11] : memref<8x128xf32, #tpu.memory_space<vmem>>, vector<8x128xf32>
      tpu.vector_store %arg10[%c0_10, %c0_11], %14 {strides = array<i32>} : memref<8x128xf32, #tpu.memory_space<vmem>>, vector<8x128xf32>,
    } else {
    }
    %c0 = arith.constant 0 : index
    %c0_1 = arith.constant 0 : index
    %3 = vector.load %arg10[%c0, %c0_1] : memref<8x128xf32, #tpu.memory_space<vmem>>, vector<8x128xf32>
    %c0_2 = arith.constant 0 : index
    %c0_3 = arith.constant 0 : index
    %4 = vector.load %arg3[%c0_2, %c0_3] : memref<8x256xf32, #tpu.memory_space<vmem>>, vector<8x256xf32>
    %5 = arith.truncf %4 : vector<8x256xf32> to vector<8x256xbf16>
    %c0_4 = arith.constant 0 : index
    %c0_5 = arith.constant 0 : index
    %6 = vector.load %arg4[%c0_4, %c0_5] : memref<256x128xf32, #tpu.memory_space<vmem>>, vector<256x128xf32>
    %7 = arith.truncf %6 : vector<256x128xf32> to vector<256x128xbf16>
    %cst = arith.constant dense<0.000000e+00> : vector<8x128xf32>
    %8 = tpu.matmul %5, %7, %cst {dimension_numbers = #tpu.dot_dimension_numbers<[1], [0], [0], [1], [0, 0, 1, 1], [], []>} : vector<8x256xbf16>, vector<256x128xbf16>, vector<8x128xf32> -> vector<8x128xf32>
    %9 = arith.addf %3, %8 : vector<8x128xf32>
    %c0_6 = arith.constant 0 : index
    %c0_7 = arith.constant 0 : index
    %10 = vector.load %arg10[%c0_6, %c0_7] : memref<8x128xf32, #tpu.memory_space<vmem>>, vector<8x128xf32>
    tpu.vector_store %arg10[%c0_6, %c0_7], %9 {strides = array<i32>} : memref<8x128xf32, #tpu.memory_space<vmem>>, vector<8x128xf32>,
    %c1_i32 = arith.constant 1 : i32
    %11 = arith.cmpi eq, %arg2, %c1_i32 : i32
    %12 = arith.extui %11 : i1 to i32
    %c0_i32_8 = arith.constant 0 : i32
    %13 = arith.cmpi ne, %12, %c0_i32_8 : i32
    scf.if %13 {
      %c0_9 = arith.constant 0 : index
      %c0_10 = arith.constant 0 : index
      %14 = vector.load %arg10[%c0_9, %c0_10] : memref<8x128xf32, #tpu.memory_space<vmem>>, vector<8x128xf32>
      %c0_11 = arith.constant 0 : index
      %c0_12 = arith.constant 0 : index
      %15 = vector.load %arg5[%c0_11, %c0_12] : memref<1x128xf32, #tpu.memory_space<vmem>>, vector<1x128xf32>
      %16 = vector.broadcast %15 : vector<1x128xf32> to vector<8x128xf32>
      %17 = arith.addf %14, %16 : vector<8x128xf32>
      %cst_13 = arith.constant 0.000000e+00 : f32
      %18 = vector.broadcast %cst_13 : f32 to vector<8x128xf32>
      %19 = arith.maximumf %17, %18 : vector<8x128xf32>
      %c0_14 = arith.constant 0 : index
      %c0_15 = arith.constant 0 : index
      %20 = vector.load %arg9[%c0_14, %c0_15] : memref<8x128xf32, #tpu.memory_space<vmem>>, vector<8x128xf32>
      tpu.vector_store %arg9[%c0_14, %c0_15], %19 {strides = array<i32>} : memref<8x128xf32, #tpu.memory_space<vmem>>, vector<8x128xf32>,
    } else {
    }
    return
  }
  func.func @transform_0(%arg0: i32, %arg1: i32, %arg2: i32) -> (i32, i32) {
    %c0_i32 = arith.constant 0 : i32
    return %arg0, %arg2 : i32, i32
  }
  func.func @transform_1(%arg0: i32, %arg1: i32, %arg2: i32) -> (i32, i32) {
    %c0_i32 = arith.constant 0 : i32
    return %arg2, %arg1 : i32, i32
  }
  func.func @transform_2(%arg0: i32, %arg1: i32, %arg2: i32) -> (i32, i32) {
    %c0_i32 = arith.constant 0 : i32
    %c0_i32_0 = arith.constant 0 : i32
    return %c0_i32, %arg1 : i32, i32
  }
  func.func @transform_3(%arg0: i32, %arg1: i32, %arg2: i32) -> (i32, i32) {
    %c0_i32 = arith.constant 0 : i32
    %c0_i32_0 = arith.constant 0 : i32
    return %c0_i32, %arg1 : i32, i32
  }
  func.func @transform_4(%arg0: i32, %arg1: i32, %arg2: i32) -> (i32, i32) {
    %c0_i32 = arith.constant 0 : i32
    %c0_i32_0 = arith.constant 0 : i32
    return %c0_i32, %arg1 : i32, i32
  }
  func.func @transform_5(%arg0: i32, %arg1: i32, %arg2: i32) -> (i32, i32) {
    %c0_i32 = arith.constant 0 : i32
    %c0_i32_0 = arith.constant 0 : i32
    %c0_i32_1 = arith.constant 0 : i32
    return %c0_i32, %c0_i32_0 : i32, i32
  }
  func.func @transform_6(%arg0: i32, %arg1: i32, %arg2: i32) -> (i32, i32) {
    %c0_i32 = arith.constant 0 : i32
    return %arg0, %arg1 : i32, i32
  }
}

</mosaic_0001>

<llo_original>
// kernel: tpu_custom_call.1
$region0: #{tpu_custom_call.1}
  #allocation0 [shape = 'u32[]', space=smem, size = 0x4, offset = 0x4, fixed_abs, tag = 'smem constant byte address 0x4 - core index']
  #allocation1 [shape = 'u32[144,128]{1,0:T(1,128)}', space=vmem, size = 0x12000, scoped, tag = 'internal scratch']
  #allocation2 [shape = 'f32[8,128]{1,0:T(8,128)}', space=vmem, size = 0x1000, scoped, tag = 'scratch operand']
  #allocation3 [shape = 'f32[1,1]{1,0:T(1,128)S(1)}', space=vmem, size = 0x200, scoped, tag = 'scoped memory for tpu_custom_call.1']
  %s0 = inlined_call_operand.hbm [shape: f32[8,512], index: 0, kind: input, shape index: {}]
  %s1 = inlined_call_operand.hbm [shape: f32[512,128], index: 1, kind: input, shape index: {}]
  %s2 = inlined_call_operand.hbm [shape: f32[1,128], index: 2, kind: input, shape index: {}]
  %s3 = inlined_call_operand.hbm [shape: f32[1,128], index: 3, kind: input, shape index: {}]
  %s4 = inlined_call_operand.hbm [shape: f32[1,128], index: 4, kind: input, shape index: {}]
  %s5 = inlined_call_operand.<no memory space> [shape: f32[1,1], index: 5, kind: input, shape index: {}]
  %s6 = inlined_call_operand.hbm [shape: f32[8,128], index: 6, kind: output, shape index: {}]
  %s7 = sld [smem:[#allocation0]]
  $region85: #{tpu_custom_call.1} parent=0
    _
  %s9 = ssub.s32 1, %s7
  %s10 = scalar_select 0, %s9, %s7
  %v11 = vstv %s5
  %12 = vst [vmem:[#allocation3] sm:$0x1] %v11
  $region1: #{tpu_custom_call.1} parent=0
    #allocation4 [shape = 'u8[16384]{0}', space=vmem, size = 0x4000, scoped, tag = 'input window, operand 0']
    #allocation5 [shape = 's32[2]{0}', space=sflag, size = 0x8, scoped, tag = 'scoped memory for tpu_custom_call.1']
    #allocation6 [shape = 's32[2]{0}', space=sflag, size = 0x8, scoped, tag = 'scoped memory for tpu_custom_call.1']
    #allocation7 [shape = 'u8[262144]{0}', space=vmem, size = 0x40000, scoped, tag = 'input window, operand 1']
    #allocation8 [shape = 's32[2]{0}', space=sflag, size = 0x8, scoped, tag = 'scoped memory for tpu_custom_call.1']
    #allocation9 [shape = 'u8[512]{0}', space=vmem, size = 0x400, scoped, tag = 'input window, operand 2, single buffered']
    #allocation10 [shape = 'u8[512]{0}', space=vmem, size = 0x400, scoped, tag = 'input window, operand 3, single buffered']
    #allocation11 [shape = 's32[1]{0}', space=sflag, size = 0x4, scoped, tag = 'scoped memory for tpu_custom_call.1']
    #allocation12 [shape = 'u8[512]{0}', space=vmem, size = 0x400, scoped, tag = 'input window, operand 4, single buffered']
    #allocation13 [shape = 'u8[4096]{0}', space=vmem, size = 0x1000, scoped, tag = 'output window, operand 0, single buffered']
    %13 = vsyncpa [#allocation5], 0
    %s14 = scalar_lea.sflag [#allocation5], 1
    %15 = vsyncpa %s14, 0
    %16 = vsyncpa [#allocation8], 0
    %s17 = scalar_lea.sflag [#allocation8], 1
    %18 = vsyncpa %s17, 0
    %19 = vsyncpa [#allocation11], 0
    %20 = vsyncpa [#allocation6], 0
    loop: start=0, step=1, limit=4
    $region2: #{tpu_custom_call.1} parent=1 // loop_pre_header
      _
    $region3: #{tpu_custom_call.1} parent=1 // loop_header
      %s22 = sphi 0, %s26
      %p23 = scmp.ge.s32.totalorder %s22, 4
      %s29 = sphi 0, %s48
      %s30 = sphi 0, %s44
      %s31 = sphi 0, %s40
      %s32 = sphi 0, %s29
      %s33 = sphi 0, %s30
      %s34 = sphi 0, %s31
      %s35 = sphi 0, %s32
      %s36 = sphi 0, %s33
      %s37 = sphi 0, %s34
      %s53 = sphi 0, %s55
      %s56 = sphi 0, %s53
      %s57 = sphi 0, %s56
      %s73 = sphi 0, %s57
      %s81 = sphi 0, %s83
      %s84 = sphi 0, %s81
      %s85 = sphi 0, %s84
      %s101 = sphi 0, %s85
      %s107 = sphi 0, %s109
      %s110 = sphi 0, %s107
      %s111 = sphi 0, %s110
      %s127 = sphi 0, %s111
      %s133 = sphi 0, %s135
      %s136 = sphi 0, %s133
      %s137 = sphi 0, %s136
      %s153 = sphi 0, %s137
      %s159 = sphi 0, %s161
      %s162 = sphi 0, %s159
      %s163 = sphi 0, %s162
      %s179 = sphi 0, %s163
      %s183 = sphi 0, %s183
      %s185 = sphi 0, %s183
      %s186 = sphi 0, %s185
      %s200 = sphi 0, %s186
      %s208 = sphi 0, %s210
      %s211 = sphi 0, %s208
      %s212 = sphi 0, %s211
      %s228 = sphi 0, %s212
    $region4: #{tpu_custom_call.1} parent=1 // loop_header_branch
      %25 = sbr.rel (%p23) target = $region8
    $region5: #{tpu_custom_call.1} parent=1 // loop_body
      %s27 = ssub.s32 %s22, 1
      %s28 = ssub.s32 %s22, 2
      %s38 = sadd.s32 1, %s31
      %p39 = scmp.ge.s32.totalorder %s38, 2
      %s40 = scalar_select %p39, 0, %s38
      %s41 = sadd.s32 1, %s30
      %s42 = scalar_select %p39, %s41, %s30
      %p43 = scmp.ge.s32.totalorder %s42, 1
      %s44 = scalar_select %p43, 0, %s42
      %s45 = sadd.s32 1, %s29
      %s46 = scalar_select %p43, %s45, %s29
      %p47 = scmp.ge.s32.totalorder %s46, 1
      %s48 = scalar_select %p47, 0, %s46
      %s49 = ssub.s32 %s29, %s48
      %s50 = ssub.s32 %s31, %s40
      %s51 = sor.u32 %s49, %s50
      %p52 = scmp.eq.s32.totalorder %s51, 0
      %s54 = sadd.s32 %s53, 1
      %s55 = scalar_select %p52, %s53, %s54
      %p58 = pneg %p52
      %p59 = scmp.eq.s32.totalorder %s22, 1
      %p60 = por %p58, %p59
      %p61 = scmp.ne.s32.totalorder %s53, %s56
      %p62 = scmp.eq.s32.totalorder %s22, 0
      %p63 = por %p61, %p62
      %p64 = scmp.ne.s32.totalorder %s53, %s56
      %p65 = scmp.eq.s32.totalorder %s27, 1
      %p66 = por %p64, %p65
      %p67 = scmp.ne.s32.totalorder %s56, %s57
      %p68 = scmp.eq.s32.totalorder %s27, 0
      %p69 = por %p67, %p68
      %p70 = scmp.ne.s32.totalorder %s56, %s57
      %p71 = scmp.eq.s32.totalorder %s28, 1
      %p72 = por %p70, %p71
      %p74 = scmp.ne.s32.totalorder %s57, %s73
      %p75 = scmp.eq.s32.totalorder %s28, 0
      %p76 = por %p74, %p75
      %s77 = ssub.s32 %s31, %s40
      %s78 = ssub.s32 %s30, %s44
      %s79 = sor.u32 %s77, %s78
      %p80 = scmp.eq.s32.totalorder %s79, 0
      %s82 = sadd.s32 %s81, 1
      %s83 = scalar_select %p80, %s81, %s82
      %p86 = pneg %p80
      %p87 = scmp.eq.s32.totalorder %s22, 1
      %p88 = por %p86, %p87
      %p89 = scmp.ne.s32.totalorder %s81, %s84
      %p90 = scmp.eq.s32.totalorder %s22, 0
      %p91 = por %p89, %p90
      %p92 = scmp.ne.s32.totalorder %s81, %s84
      %p93 = scmp.eq.s32.totalorder %s27, 1
      %p94 = por %p92, %p93
      %p95 = scmp.ne.s32.totalorder %s84, %s85
      %p96 = scmp.eq.s32.totalorder %s27, 0
      %p97 = por %p95, %p96
      %p98 = scmp.ne.s32.totalorder %s84, %s85
      %p99 = scmp.eq.s32.totalorder %s28, 1
      %p100 = por %p98, %p99
      %p102 = scmp.ne.s32.totalorder %s85, %s101
      %p103 = scmp.eq.s32.totalorder %s28, 0
      %p104 = por %p102, %p103
      %s105 = ssub.s32 %s30, %s44
      %p106 = scmp.eq.s32.totalorder %s105, 0
      %s108 = sadd.s32 %s107, 1
      %s109 = scalar_select %p106, %s107, %s108
      %p112 = pneg %p106
      %p113 = scmp.eq.s32.totalorder %s22, 1
      %p114 = por %p112, %p113
      %p115 = scmp.ne.s32.totalorder %s107, %s110
      %p116 = scmp.eq.s32.totalorder %s22, 0
      %p117 = por %p115, %p116
      %p118 = scmp.ne.s32.totalorder %s107, %s110
      %p119 = scmp.eq.s32.totalorder %s27, 1
      %p120 = por %p118, %p119
      %p121 = scmp.ne.s32.totalorder %s110, %s111
      %p122 = scmp.eq.s32.totalorder %s27, 0
      %p123 = por %p121, %p122
      %p124 = scmp.ne.s32.totalorder %s110, %s111
      %p125 = scmp.eq.s32.totalorder %s28, 1
      %p126 = por %p124, %p125
      %p128 = scmp.ne.s32.totalorder %s111, %s127
      %p129 = scmp.eq.s32.totalorder %s28, 0
      %p130 = por %p128, %p129
      %s131 = ssub.s32 %s30, %s44
      %p132 = scmp.eq.s32.totalorder %s131, 0
      %s134 = sadd.s32 %s133, 1
      %s135 = scalar_select %p132, %s133, %s134
      %p138 = pneg %p132
      %p139 = scmp.eq.s32.totalorder %s22, 1
      %p140 = por %p138, %p139
      %p141 = scmp.ne.s32.totalorder %s133, %s136
      %p142 = scmp.eq.s32.totalorder %s22, 0
      %p143 = por %p141, %p142
      %p144 = scmp.ne.s32.totalorder %s133, %s136
      %p145 = scmp.eq.s32.totalorder %s27, 1
      %p146 = por %p144, %p145
      %p147 = scmp.ne.s32.totalorder %s136, %s137
      %p148 = scmp.eq.s32.totalorder %s27, 0
      %p149 = por %p147, %p148
      %p150 = scmp.ne.s32.totalorder %s136, %s137
      %p151 = scmp.eq.s32.totalorder %s28, 1
      %p152 = por %p150, %p151
      %p154 = scmp.ne.s32.totalorder %s137, %s153
      %p155 = scmp.eq.s32.totalorder %s28, 0
      %p156 = por %p154, %p155
      %s157 = ssub.s32 %s30, %s44
      %p158 = scmp.eq.s32.totalorder %s157, 0
      %s160 = sadd.s32 %s159, 1
      %s161 = scalar_select %p158, %s159, %s160
      %p164 = pneg %p158
      %p165 = scmp.eq.s32.totalorder %s22, 1
      %p166 = por %p164, %p165
      %p167 = scmp.ne.s32.totalorder %s159, %s162
      %p168 = scmp.eq.s32.totalorder %s22, 0
      %p169 = por %p167, %p168
      %p170 = scmp.ne.s32.totalorder %s159, %s162
      %p171 = scmp.eq.s32.totalorder %s27, 1
      %p172 = por %p170, %p171
      %p173 = scmp.ne.s32.totalorder %s162, %s163
      %p174 = scmp.eq.s32.totalorder %s27, 0
      %p175 = por %p173, %p174
      %p176 = scmp.ne.s32.totalorder %s162, %s163
      %p177 = scmp.eq.s32.totalorder %s28, 1
      %p178 = por %p176, %p177
      %p180 = scmp.ne.s32.totalorder %s163, %s179
      %p181 = scmp.eq.s32.totalorder %s28, 0
      %p182 = por %p180, %p181
      %s184 = sadd.s32 %s183, 1
      %p187 = scmp.eq.s32.totalorder %s22, 1
      %p188 = scmp.ne.s32.totalorder %s183, %s185
      %p189 = scmp.eq.s32.totalorder %s22, 0
      %p190 = por %p188, %p189
      %p191 = scmp.ne.s32.totalorder %s183, %s185
      %p192 = scmp.eq.s32.totalorder %s27, 1
      %p193 = por %p191, %p192
      %p194 = scmp.ne.s32.totalorder %s185, %s186
      %p195 = scmp.eq.s32.totalorder %s27, 0
      %p196 = por %p194, %p195
      %p197 = scmp.ne.s32.totalorder %s185, %s186
      %p198 = scmp.eq.s32.totalorder %s28, 1
      %p199 = por %p197, %p198
      %p201 = scmp.ne.s32.totalorder %s186, %s200
      %p202 = scmp.eq.s32.totalorder %s28, 0
      %p203 = por %p201, %p202
      %s204 = ssub.s32 %s29, %s48
      %s205 = ssub.s32 %s30, %s44
      %s206 = sor.u32 %s204, %s205
      %p207 = scmp.eq.s32.totalorder %s206, 0
      %s209 = sadd.s32 %s208, 1
      %s210 = scalar_select %p207, %s208, %s209
      %p213 = pneg %p207
      %p214 = scmp.eq.s32.totalorder %s22, 1
      %p215 = por %p213, %p214
      %p216 = scmp.ne.s32.totalorder %s208, %s211
      %p217 = scmp.eq.s32.totalorder %s22, 0
      %p218 = por %p216, %p217
      %p219 = scmp.ne.s32.totalorder %s208, %s211
      %p220 = scmp.eq.s32.totalorder %s27, 1
      %p221 = por %p219, %p220
      %p222 = scmp.ne.s32.totalorder %s211, %s212
      %p223 = scmp.eq.s32.totalorder %s27, 0
      %p224 = por %p222, %p223
      %p225 = scmp.ne.s32.totalorder %s211, %s212
      %p226 = scmp.eq.s32.totalorder %s28, 1
      %p227 = por %p225, %p226
      %p229 = scmp.ne.s32.totalorder %s212, %s228
      %p230 = scmp.eq.s32.totalorder %s28, 0
      %p231 = por %p229, %p230
      %p232 = scmp.le.s32.totalorder 1, %s22
      %p233 = scmp.lt.s32.totalorder %s22, 3
      %p234 = pnand %p232, %p233
      %p235 = pneg %p234
      // Predicated region
      $region9: #{tpu_custom_call.1} parent=5 // pred_check
        _
      $region10: #{tpu_custom_call.1} parent=5 // pred_check_branch
        %237 = sbr.rel (%p234) target = $region12
      $region11: #{tpu_custom_call.1} parent=5 // pred_region
        %s238 = ssub.s32 %s22, 1
        // Predicated region
        $region13: #{tpu_custom_call.1} parent=11 // pred_check
          %p239 = pneg %p123
        $region14: #{tpu_custom_call.1} parent=11 // pred_check_branch
          %241 = sbr.rel (%p239) target = $region16
        $region15: #{tpu_custom_call.1} parent=11 // pred_region
          %s243 = ssub.s32 16, 16
          %244 = vsyncadd [#allocation8], %s243
          %s245 = smul.addr %s33, 16
          %s246 = scalar_lea.hbm %s2, %s245
          %s248 = sshll.u32 [#allocation9], 4
          %s249 = int_to_ptr.vmem [resolvable:$true] %s248
          %251 = dma.hbm_to_vmem [thread:$0]  %s246, 16, %s249, [#allocation8]
        $region16: #{tpu_custom_call.1} parent=11 // pred_fallthru
          _
        // Predicated region
        $region17: #{tpu_custom_call.1} parent=11 // pred_check
          %p252 = pneg %p149
        $region18: #{tpu_custom_call.1} parent=11 // pred_check_branch
          %254 = sbr.rel (%p252) target = $region20
        $region19: #{tpu_custom_call.1} parent=11 // pred_region
          %s256 = ssub.s32 16, 16
          %257 = vsyncadd [#allocation11], %s256
          %s258 = smul.addr %s33, 16
          %s259 = scalar_lea.hbm %s3, %s258
          %s261 = sshll.u32 [#allocation10], 4
          %s262 = int_to_ptr.vmem [resolvable:$true] %s261
          %264 = dma.hbm_to_vmem [thread:$0]  %s259, 16, %s262, [#allocation11]
        $region20: #{tpu_custom_call.1} parent=11 // pred_fallthru
          _
        // Predicated region
        $region21: #{tpu_custom_call.1} parent=11 // pred_check
          %p265 = pneg %p175
        $region22: #{tpu_custom_call.1} parent=11 // pred_check_branch
          %267 = sbr.rel (%p265) target = $region24
        $region23: #{tpu_custom_call.1} parent=11 // pred_region
          %s269 = ssub.s32 16, 16
          %270 = vsyncadd [#allocation11], %s269
          %s271 = smul.addr %s33, 16
          %s272 = scalar_lea.hbm %s4, %s271
          %s274 = sshll.u32 [#allocation12], 4
          %s275 = int_to_ptr.vmem [resolvable:$true] %s274
          %277 = dma.hbm_to_vmem [thread:$0]  %s272, 16, %s275, [#allocation11]
        $region24: #{tpu_custom_call.1} parent=11 // pred_fallthru
          _
        // Predicated region
        $region25: #{tpu_custom_call.1} parent=11 // pred_check
          %p278 = pneg %p196
        $region26: #{tpu_custom_call.1} parent=11 // pred_check_branch
          %280 = sbr.rel (%p278) target = $region28
        $region27: #{tpu_custom_call.1} parent=11 // pred_region
          _
        $region28: #{tpu_custom_call.1} parent=11 // pred_fallthru
          _
      $region12: #{tpu_custom_call.1} parent=5 // pred_fallthru
        _
      %p281 = scmp.lt.s32.totalorder %s22, 2
      // Predicated region
      $region29: #{tpu_custom_call.1} parent=5 // pred_check
        %p282 = pneg %p281
      $region30: #{tpu_custom_call.1} parent=5 // pred_check_branch
        %284 = sbr.rel (%p282) target = $region32
      $region31: #{tpu_custom_call.1} parent=5 // pred_region
        // Predicated region
        $region33: #{tpu_custom_call.1} parent=31 // pred_check
          %p285 = pneg %p63
        $region34: #{tpu_custom_call.1} parent=31 // pred_check_branch
          %287 = sbr.rel (%p285) target = $region36
        $region35: #{tpu_custom_call.1} parent=31 // pred_region
          %s288 = sand.u32 %s53, 1
          %s289 = scalar_lea.sflag [#allocation5], %s288
          %s290 = sand.u32 %s53, 1
          %s291 = smul.addr %s290, 16
          %s292 = scalar_lea.vmem [#allocation4], %s291
          %s293 = smul.u32 2, %s31
          %s295 = ssub.s32 256, 256
          %296 = vsyncadd %s289, %s295
          %s297 = smul.addr %s29, 4
          %s298 = sadd.s32 %s293, %s297
          %s299 = smul.addr %s298, 128
          %s300 = scalar_lea.hbm %s0, %s299
          %s302 = sshll.u32 %s292, 4
          %s303 = int_to_ptr.vmem [resolvable:$true] %s302
          %305 = dma.hbm_to_vmem [thread:$0]  %s300, 256, %s303, %s289
        $region36: #{tpu_custom_call.1} parent=31 // pred_fallthru
          _
        // Predicated region
        $region37: #{tpu_custom_call.1} parent=31 // pred_check
          %p306 = pneg %p91
        $region38: #{tpu_custom_call.1} parent=31 // pred_check_branch
          %308 = sbr.rel (%p306) target = $region40
        $region39: #{tpu_custom_call.1} parent=31 // pred_region
          %s309 = sand.u32 %s22, 1
          %s310 = scalar_lea.sflag [#allocation8], %s309
          %s311 = sand.u32 %s81, 1
          %s312 = smul.addr %s311, 256
          %s313 = scalar_lea.vmem [#allocation7], %s312
          %s314 = smul.u32 32, %s31
          %s316 = ssub.s32 4096, 4096
          %317 = vsyncadd %s310, %s316
          %s318 = sadd.s32 %s30, %s314
          %s319 = smul.addr %s318, 128
          %s320 = scalar_lea.hbm %s1, %s319
          %s321 = sshll.u32 %s313, 4
          %s322 = int_to_ptr.vmem [resolvable:$true] %s321
          %327 = dma.hbm_to_vmem [thread:$0]  %s320, 4096, %s322, %s310, 128, 128, 8
        $region40: #{tpu_custom_call.1} parent=31 // pred_fallthru
          _
      $region32: #{tpu_custom_call.1} parent=5 // pred_fallthru
        _
      %p328 = scmp.le.s32.totalorder 1, %s22
      %p329 = scmp.lt.s32.totalorder %s22, 3
      %p330 = pnand %p328, %p329
      %p331 = pneg %p330
      // Predicated region
      $region41: #{tpu_custom_call.1} parent=5 // pred_check
        _
      $region42: #{tpu_custom_call.1} parent=5 // pred_check_branch
        %333 = sbr.rel (%p330) target = $region44
      $region43: #{tpu_custom_call.1} parent=5 // pred_region
        %s334 = ssub.s32 %s22, 1
        %s335 = sand.u32 %s56, 1
        %s336 = scalar_lea.sflag [#allocation5], %s335
        %s337 = sand.u32 %s56, 1
        %s338 = smul.addr %s337, 16
        %s339 = scalar_lea.vmem [#allocation4], %s338
        // Predicated region
        $region45: #{tpu_custom_call.1} parent=43 // pred_check
          %p340 = pneg %p69
        $region46: #{tpu_custom_call.1} parent=43 // pred_check_branch
          %342 = sbr.rel (%p340) target = $region48
        $region47: #{tpu_custom_call.1} parent=43 // pred_region
          %343 = dma.done %s336, 256
        $region48: #{tpu_custom_call.1} parent=43 // pred_fallthru
          _
        %s344 = sand.u32 %s27, 1
        %s345 = scalar_lea.sflag [#allocation8], %s344
        %s346 = sand.u32 %s84, 1
        %s347 = smul.addr %s346, 256
        %s348 = scalar_lea.vmem [#allocation7], %s347
        // Predicated region
        $region49: #{tpu_custom_call.1} parent=43 // pred_check
          %p349 = pneg %p97
        $region50: #{tpu_custom_call.1} parent=43 // pred_check_branch
          %351 = sbr.rel (%p349) target = $region52
        $region51: #{tpu_custom_call.1} parent=43 // pred_region
          %352 = dma.done %s345, 4096
        $region52: #{tpu_custom_call.1} parent=43 // pred_fallthru
          _
        // Predicated region
        $region53: #{tpu_custom_call.1} parent=43 // pred_check
          %p353 = pneg %p123
        $region54: #{tpu_custom_call.1} parent=43 // pred_check_branch
          %355 = sbr.rel (%p353) target = $region56
        $region55: #{tpu_custom_call.1} parent=43 // pred_region
          %356 = dma.done [#allocation8], 16
        $region56: #{tpu_custom_call.1} parent=43 // pred_fallthru
          _
        // Predicated region
        $region57: #{tpu_custom_call.1} parent=43 // pred_check
          %p357 = pneg %p149
        $region58: #{tpu_custom_call.1} parent=43 // pred_check_branch
          %359 = sbr.rel (%p357) target = $region60
        $region59: #{tpu_custom_call.1} parent=43 // pred_region
          %360 = dma.done [#allocation11], 16
        $region60: #{tpu_custom_call.1} parent=43 // pred_fallthru
          _
        // Predicated region
        $region61: #{tpu_custom_call.1} parent=43 // pred_check
          %p361 = pneg %p175
        $region62: #{tpu_custom_call.1} parent=43 // pred_check_branch
          %363 = sbr.rel (%p361) target = $region64
        $region63: #{tpu_custom_call.1} parent=43 // pred_region
          %364 = dma.done [#allocation11], 16
        $region64: #{tpu_custom_call.1} parent=43 // pred_fallthru
          _
        %s365 = sand.u32 %s56, 1
        %s366 = scalar_lea.sflag [#allocation5], %s365
        %s367 = sand.u32 %s56, 1
        %s368 = smul.addr %s367, 16
        %s369 = scalar_lea.vmem [#allocation4], %s368
        %p370 = pneg %p69
        %p371 = pneg %p66
        %s372 = sand.u32 %s27, 1
        %s373 = scalar_lea.sflag [#allocation8], %s372
        %s374 = sand.u32 %s84, 1
        %s375 = smul.addr %s374, 256
        %s376 = scalar_lea.vmem [#allocation7], %s375
        %p377 = pneg %p97
        %p378 = pneg %p94
        %p379 = pneg %p123
        %p380 = pneg %p120
        %p381 = pneg %p149
        %p382 = pneg %p146
        %p383 = pneg %p175
        %p384 = pneg %p172
        %p385 = pneg %p196
        %p386 = pneg %p193
        %p387 = pneg %p224
        %p388 = pneg %p221
        %s389 = smul.u32 2, %s34
        %s390 = smul.u32 32, %s34
        %p392 = scmp.eq.s32.totalorder %s34, 0
        // Predicated region
        $region65: #{tpu_custom_call.1} parent=43 // pred_check
          %p393 = pneg %p392
        $region66: #{tpu_custom_call.1} parent=43 // pred_check_branch
          %395 = sbr.rel (%p393) target = $region68
        $region67: #{tpu_custom_call.1} parent=43 // pred_region
          %396 = vst [vmem:[#allocation2] sm:$0xff] 0.0
        $region68: #{tpu_custom_call.1} parent=43 // pred_fallthru
          _
        %v397 = vld [vmem:[#allocation2] sm:$0xff]
        %v398 = vld [vmem:[%s339] sm:$0xff]
        %v399 = vld [vmem:[%s339 + $0x8] sm:$0xff]
        %v400 = vpack.c.bf16 %v398, %v398
        %v401 = vpack.c.bf16 %v399, %v399
        %v402 = vld [vmem:[%s348] sm:$0xff]
        %v403 = vld [vmem:[%s348 + $0x8] sm:$0xff]
        %v404 = vld [vmem:[%s348 + $0x10] sm:$0xff]
        %v405 = vld [vmem:[%s348 + $0x18] sm:$0xff]
        %v406 = vld [vmem:[%s348 + $0x20] sm:$0xff]
        %v407 = vld [vmem:[%s348 + $0x28] sm:$0xff]
        %v408 = vld [vmem:[%s348 + $0x30] sm:$0xff]
        %v409 = vld [vmem:[%s348 + $0x38] sm:$0xff]
        %v410 = vld [vmem:[%s348 + $0x40] sm:$0xff]
        %v411 = vld [vmem:[%s348 + $0x48] sm:$0xff]
        %v412 = vld [vmem:[%s348 + $0x50] sm:$0xff]
        %v413 = vld [vmem:[%s348 + $0x58] sm:$0xff]
        %v414 = vld [vmem:[%s348 + $0x60] sm:$0xff]
        %v415 = vld [vmem:[%s348 + $0x68] sm:$0xff]
        %v416 = vld [vmem:[%s348 + $0x70] sm:$0xff]
        %v417 = vld [vmem:[%s348 + $0x78] sm:$0xff]
        %v418 = vld [vmem:[%s348 + $0x80] sm:$0xff]
        %v419 = vld [vmem:[%s348 + $0x88] sm:$0xff]
        %v420 = vld [vmem:[%s348 + $0x90] sm:$0xff]
        %v421 = vld [vmem:[%s348 + $0x98] sm:$0xff]
        %v422 = vld [vmem:[%s348 + $0xa0] sm:$0xff]
        %v423 = vld [vmem:[%s348 + $0xa8] sm:$0xff]
        %v424 = vld [vmem:[%s348 + $0xb0] sm:$0xff]
        %v425 = vld [vmem:[%s348 + $0xb8] sm:$0xff]
        %v426 = vld [vmem:[%s348 + $0xc0] sm:$0xff]
        %v427 = vld [vmem:[%s348 + $0xc8] sm:$0xff]
        %v428 = vld [vmem:[%s348 + $0xd0] sm:$0xff]
        %v429 = vld [vmem:[%s348 + $0xd8] sm:$0xff]
        %v430 = vld [vmem:[%s348 + $0xe0] sm:$0xff]
        %v431 = vld [vmem:[%s348 + $0xe8] sm:$0xff]
        %v432 = vld [vmem:[%s348 + $0xf0] sm:$0xff]
        %v433 = vld [vmem:[%s348 + $0xf8] sm:$0xff]
        %v434 = vpack.c.bf16 %v403, %v402
        %v435 = vpack.c.bf16 %v405, %v404
        %v436 = vpack.c.bf16 %v407, %v406
        %v437 = vpack.c.bf16 %v409, %v408
        %v438 = vpack.c.bf16 %v411, %v410
        %v439 = vpack.c.bf16 %v413, %v412
        %v440 = vpack.c.bf16 %v415, %v414
        %v441 = vpack.c.bf16 %v417, %v416
        %v442 = vpack.c.bf16 %v419, %v418
        %v443 = vpack.c.bf16 %v421, %v420
        %v444 = vpack.c.bf16 %v423, %v422
        %v445 = vpack.c.bf16 %v425, %v424
        %v446 = vpack.c.bf16 %v427, %v426
        %v447 = vpack.c.bf16 %v429, %v428
        %v448 = vpack.c.bf16 %v431, %v430
        %v449 = vpack.c.bf16 %v433, %v432
        %450 = vmatprep.subr.bf16.mxu0 0
        %451 = vmatpush1.bf16.msra.mxu0 %v434
        %452 = vmatprep.subr.bf16.mxu0 0
        %453 = vmatpush1.bf16.msra.mxu0 %v435
        %454 = vmatprep.subr.bf16.mxu0 0
        %455 = vmatpush1.bf16.msra.mxu0 %v436
        %456 = vmatprep.subr.bf16.mxu0 0
        %457 = vmatpush1.bf16.msra.mxu0 %v437
        %458 = vmatprep.subr.bf16.mxu0 0
        %459 = vmatpush1.bf16.msra.mxu0 %v438
        %460 = vmatprep.subr.bf16.mxu0 0
        %461 = vmatpush1.bf16.msra.mxu0 %v439
        %462 = vmatprep.subr.bf16.mxu0 0
        %463 = vmatpush1.bf16.msra.mxu0 %v440
        %464 = vmatprep.subr.bf16.mxu0 0
        %465 = vmatpush1.bf16.msra.mxu0 %v441
        %466 = vmatprep.subr.bf16.mxu0 0
        %467 = vmatpush1.bf16.msra.mxu0 %v442
        %468 = vmatprep.subr.bf16.mxu0 0
        %469 = vmatpush1.bf16.msra.mxu0 %v443
        %470 = vmatprep.subr.bf16.mxu0 0
        %471 = vmatpush1.bf16.msra.mxu0 %v444
        %472 = vmatprep.subr.bf16.mxu0 0
        %473 = vmatpush1.bf16.msra.mxu0 %v445
        %474 = vmatprep.subr.bf16.mxu0 0
        %475 = vmatpush1.bf16.msra.mxu0 %v446
        %476 = vmatprep.subr.bf16.mxu0 0
        %477 = vmatpush1.bf16.msra.mxu0 %v447
        %478 = vmatprep.subr.bf16.mxu0 0
        %479 = vmatpush1.bf16.msra.mxu0 %v448
        %480 = vmatprep.subr.bf16.mxu0 0
        %481 = vmatpush1.bf16.msra.mxu0 %v449
        %482 = vmatprep.mubr.bf16.mxu0 %v401
        %483 = vmatmul.mubr.bf16.gmra.mrb[0].mxu0 %v400
        %v484 = vpop.f32.mrb[0].mxu0
        %v485 = vadd.f32 0.0, %v484
        %v486 = vpop.f32.mrb[0].mxu0
        %v487 = vpop.f32.mrb[0].mxu0
        %v488 = vpop.f32.mrb[0].mxu0
        %489 = vdwg.mxu0
        %v490 = vadd.f32 %v397, %v485
        %491 = vst [vmem:[#allocation2] sm:$0xff] %v490
        %p492 = scmp.eq.s32.totalorder %s34, 1
        // Predicated region
        $region69: #{tpu_custom_call.1} parent=43 // pred_check
          %p493 = pneg %p492
        $region70: #{tpu_custom_call.1} parent=43 // pred_check_branch
          %495 = sbr.rel (%p493) target = $region72
        $region71: #{tpu_custom_call.1} parent=43 // pred_region
          %v496 = vld [vmem:[#allocation2] sm:$0xff]
          %v497 = vld [vmem:[#allocation9] sm:$0x1]
          %v499 = vlaneseq
          %v500 = vshrl.u32 %v499, 7
          %v501 = vsub.s32 0, %v500
          %v502 = vrot.slane %v497, %v501
          %v504 = vadd.f32 %v496, %v502
          %v505 = vmax.f32 %v504, 0.0
          %506 = vst [vmem:[#allocation13] sm:$0xff] %v505
        $region72: #{tpu_custom_call.1} parent=43 // pred_fallthru
          _
        // Predicated region
        $region73: #{tpu_custom_call.1} parent=43 // pred_check
          %p507 = pneg %p221
        $region74: #{tpu_custom_call.1} parent=43 // pred_check_branch
          %509 = sbr.rel (%p507) target = $region76
        $region75: #{tpu_custom_call.1} parent=43 // pred_region
          %s511 = ssub.s32 128, 128
          %512 = vsyncadd [#allocation6], %s511
          %s513 = sadd.s32 %s33, %s32
          %s514 = smul.addr %s513, 128
          %s515 = scalar_lea.hbm %s6, %s514
          %s517 = sshll.u32 [#allocation13], 4
          %s518 = int_to_ptr.vmem [resolvable:$true] %s517
          %520 = dma.vmem_to_hbm [thread:$0]  %s518, 128, %s515, [#allocation6]
        $region76: #{tpu_custom_call.1} parent=43 // pred_fallthru
          _
        // Predicated region
        $region77: #{tpu_custom_call.1} parent=43 // pred_check
          %p521 = pneg %p221
        $region78: #{tpu_custom_call.1} parent=43 // pred_check_branch
          %523 = sbr.rel (%p521) target = $region80
        $region79: #{tpu_custom_call.1} parent=43 // pred_region
          %524 = dma.done [#allocation6], 128
        $region80: #{tpu_custom_call.1} parent=43 // pred_fallthru
          _
      $region44: #{tpu_custom_call.1} parent=5 // pred_fallthru
        _
      %p525 = scmp.le.s32.totalorder 2, %s22
      // Predicated region
      $region81: #{tpu_custom_call.1} parent=5 // pred_check
        %p526 = pneg %p525
      $region82: #{tpu_custom_call.1} parent=5 // pred_check_branch
        %528 = sbr.rel (%p526) target = $region84
      $region83: #{tpu_custom_call.1} parent=5 // pred_region
        %s529 = ssub.s32 %s22, 2
      $region84: #{tpu_custom_call.1} parent=5 // pred_fallthru
        _
    $region6: #{tpu_custom_call.1} parent=1 // loop_footer
      %s26 = sadd.s32 1, %s22
    $region7: #{tpu_custom_call.1} parent=1 // loop_footer_branch
      %21 = sbr.rel target = $region3
    $region8: #{tpu_custom_call.1} parent=1 // loop_exit
      _
    %530 = vsyncpa [#allocation5], 1
    %s531 = scalar_lea.sflag [#allocation5], 1
    %532 = vsyncpa %s531, 1
    %533 = vsyncpa [#allocation8], 1
    %s534 = scalar_lea.sflag [#allocation8], 1
    %535 = vsyncpa %s534, 1
    %536 = vsyncpa [#allocation11], 1
    %537 = vsyncpa [#allocation6], 1
    %s538 = scalar_lea.sflag [#allocation6], 1
    %539 = vsyncpa %s538, 1

</llo_original>
